<compile_context>
chip_gen: v7x
topology: tpu7x:2x2x1
jax: 0.10.0
libtpu: 0.0.40
codegen_flags: <defaults>
</compile_context>

<pallas_src>
import functools

import jax
import jax.numpy as jnp
from jax.experimental import pallas as pl
from jax.experimental.pallas import tpu as pltpu

HIDDEN = 1024  # "w1" in the PyTorch module (linear1 out / linear6 in)


def _round_up(x, m):
    return ((x + m - 1) // m) * m


def _mlp_kernel(x_ref, w1_ref, b1_ref, w2_ref, b2_ref, o_ref):
    # x arrives as f32 from HBM; cast to bf16 in vregs (cheap VPU work) so the
    # MXU runs bf16 inputs with f32 accumulation.
    x = x_ref[...].astype(jnp.bfloat16)
    # layer 1: (TB, IN) @ (IN, HIDDEN) -> f32 acc, + bias, ReLU
    h = jnp.dot(x, w1_ref[...], preferred_element_type=jnp.float32)
    h = jnp.maximum(h + b1_ref[...], 0.0)
    # layer 2: (TB, HIDDEN) @ (HIDDEN, OUT_PAD) -> f32 acc, + bias
    out = jnp.dot(h.astype(jnp.bfloat16), w2_ref[...],
                  preferred_element_type=jnp.float32)
    o_ref[...] = (out + b2_ref[...]).astype(o_ref.dtype)


def prepare_params(params):
    """One-time conversion of f32 (in, out)-layout params into kernel layout.

    Call ONCE and reuse the result across forward calls so no per-call
    convert/pad ops run. Returns (prepared_params, output_size).
    """
    w1, b1 = params["w1"], params["b1"]
    w2, b2 = params["w2"], params["b2"]
    out_dim = w2.shape[1]
    out_pad = _round_up(out_dim, 128)  # lane-dense output slab
    prepared = {
        "w1": w1.astype(jnp.bfloat16),
        "b1": jnp.asarray(b1, jnp.float32).reshape(1, HIDDEN),
        "w2": jnp.zeros((HIDDEN, out_pad), jnp.bfloat16)
              .at[:, :out_dim].set(w2.astype(jnp.bfloat16)),
        "b2": jnp.zeros((1, out_pad), jnp.float32)
              .at[:, :out_dim].set(jnp.asarray(b2, jnp.float32).reshape(1, out_dim)),
    }
    return prepared, out_dim


@functools.partial(jax.jit, static_argnames=("out_dim", "batch_tile"))
def prediction_model_forward(state, prepared, *, out_dim, batch_tile=512):
    """state: (B, input_size) float32. prepared: output of prepare_params()."""
    w1, b1 = prepared["w1"], prepared["b1"]
    w2, b2 = prepared["w2"], prepared["b2"]

    b, in_dim = state.shape
    out_pad = w2.shape[1]

    # Batch tile: multiple of 16 (bf16 sublane packing), large to amortize
    # per-grid-step overhead, but small enough that batches > 128 still give
    # >= 2 "parallel" grid steps (so both v7x TensorCores get work).
    tb = min(batch_tile, _round_up(b, 16))
    if b > 128 and pl.cdiv(b, tb) < 2:
        tb = _round_up(pl.cdiv(b, 2), 16)
    grid = (pl.cdiv(b, tb),)

    # Explicit scoped-VMEM budget (v5e default is only 16 MiB): double-buffered
    # x/out tiles + single-buffered resident weights + f32 hidden headroom.
    vmem_bytes = (
        2 * tb * in_dim * 4          # x tile, double-buffered, f32
        + in_dim * HIDDEN * 2        # w1 (bf16, resident, single-buffered)
        + HIDDEN * out_pad * 2       # w2 (bf16, resident)
        + (HIDDEN + out_pad) * 4     # biases
        + 2 * tb * out_pad * 4       # out tile, double-buffered, f32
        + 4 * tb * HIDDEN * 4        # f32 hidden intermediate + headroom
    )
    vmem_limit = int(min(max(vmem_bytes, 32 << 20), 48 << 20))

    resident = dict(pipeline_mode=pl.Buffered(1))  # block index never changes
    out = pl.pallas_call(
        _mlp_kernel,
        out_shape=jax.ShapeDtypeStruct((b, out_pad), jnp.float32),
        grid=grid,
        in_specs=[
            pl.BlockSpec((tb, in_dim), lambda i: (i, 0)),                   # x (streamed)
            pl.BlockSpec((in_dim, HIDDEN), lambda i: (0, 0), **resident),   # w1
            pl.BlockSpec((1, HIDDEN), lambda i: (0, 0), **resident),        # b1
            pl.BlockSpec((HIDDEN, out_pad), lambda i: (0, 0), **resident),  # w2
            pl.BlockSpec((1, out_pad), lambda i: (0, 0), **resident),       # b2
        ],
        out_specs=pl.BlockSpec((tb, out_pad), lambda i: (i, 0)),
        compiler_params=pltpu.CompilerParams(
            dimension_semantics=("parallel",),
            vmem_limit_bytes=vmem_limit),
    )(state, w1, b1, w2, b2)

    return out[:, :out_dim] if out_pad != out_dim else out


def init_params(key, input_size, output_size):
    """Mimics PyTorch nn.Linear default init: U(-1/sqrt(fan_in), +1/sqrt(fan_in))."""
    def linear_init(k, fan_in, fan_out):
        kw, kb = jax.random.split(k)
        bound = 1.0 / jnp.sqrt(float(fan_in))
        # stored as (in, out) so the kernel computes x @ W + b == F.linear(x, W_pt, b)
        w = jax.random.uniform(kw, (fan_in, fan_out), jnp.float32, -bound, bound)
        b = jax.random.uniform(kb, (1, fan_out), jnp.float32, -bound, bound)
        return w, b

    k1, k2 = jax.random.split(key)
    w1, b1 = linear_init(k1, input_size, HIDDEN)   # linear1
    w2, b2 = linear_init(k2, HIDDEN, output_size)  # linear6
    return {"w1": w1, "b1": b1, "w2": w2, "b2": b2}


def _reference_forward(state, params):
    h = jnp.maximum(state @ params["w1"] + params["b1"], 0.0)
    return h @ params["w2"] + params["b2"]


if __name__ == "__main__":
    key = jax.random.PRNGKey(0)
    k_params, k_x = jax.random.split(key)

    input_size, output_size = 32, 8
    params = init_params(k_params, input_size, output_size)
    prepared, out_dim = prepare_params(params)   # one-time weight prep

    # Case 1: small batch, exact tile.
    batch = 16
    state = jax.random.normal(k_x, (batch, input_size), jnp.float32)
    out = jax.block_until_ready(
        prediction_model_forward(state, prepared, out_dim=out_dim))
    ref = _reference_forward(state, params)
    assert out.shape == (batch, output_size), out.shape
    # bf16 operands with f32 accumulation -> loose tolerance vs f32 reference
    assert jnp.allclose(out, ref, atol=5e-2, rtol=5e-2), "mismatch (batch=16)"

    # Case 2: batch not a multiple of the tile -> exercises the partial last
    # block's masked read/write path.
    batch2 = 24
    state2 = jax.random.normal(jax.random.PRNGKey(1), (batch2, input_size),
                               jnp.float32)
    out2 = jax.block_until_ready(
        prediction_model_forward(state2, prepared, out_dim=out_dim,
                                 batch_tile=16))
    ref2 = _reference_forward(state2, params)
    assert out2.shape == (batch2, output_size), out2.shape
    assert jnp.allclose(out2, ref2, atol=5e-2, rtol=5e-2), "mismatch (batch=24)"

    print("KERNEL_OK")
</pallas_src>

<mosaic_0001>
module attributes {stable_mosaic.version = 11 : i64} {
  func.func @_mlp_kernel(%arg0: i32, %arg1: memref<16x32xf32, #tpu.memory_space<vmem>>, %arg2: memref<32x1024xbf16, #tpu.memory_space<vmem>>, %arg3: memref<1x1024xf32, #tpu.memory_space<vmem>>, %arg4: memref<1024x128xbf16, #tpu.memory_space<vmem>>, %arg5: memref<1x128xf32, #tpu.memory_space<vmem>>, %arg6: memref<16x128xf32, #tpu.memory_space<vmem>>) attributes {dimension_semantics = [#tpu.dimension_semantics<parallel>], iteration_bounds = array<i64: 1>, scalar_prefetch = 0 : i64, scratch_operands = 0 : i64, tpu.core_type = #tpu.core_type<tc>, window_params = [{transform_indices = @transform_0, window_bounds = array<i64: 16, 32>}, {pipeline_mode = #tpu.pipeline_mode<synchronous>, transform_indices = @transform_1, window_bounds = array<i64: 32, 1024>}, {pipeline_mode = #tpu.pipeline_mode<synchronous>, transform_indices = @transform_2, window_bounds = array<i64: 1, 1024>}, {pipeline_mode = #tpu.pipeline_mode<synchronous>, transform_indices = @transform_3, window_bounds = array<i64: 1024, 128>}, {pipeline_mode = #tpu.pipeline_mode<synchronous>, transform_indices = @transform_4, window_bounds = array<i64: 1, 128>}, {transform_indices = @transform_5, window_bounds = array<i64: 16, 128>}]} {
    %c0 = arith.constant 0 : index
    %c0_0 = arith.constant 0 : index
    %0 = vector.load %arg1[%c0, %c0_0] : memref<16x32xf32, #tpu.memory_space<vmem>>, vector<16x32xf32>
    %1 = arith.truncf %0 : vector<16x32xf32> to vector<16x32xbf16>
    %c0_1 = arith.constant 0 : index
    %c0_2 = arith.constant 0 : index
    %2 = vector.load %arg2[%c0_1, %c0_2] : memref<32x1024xbf16, #tpu.memory_space<vmem>>, vector<32x1024xbf16>
    %cst = arith.constant dense<0.000000e+00> : vector<16x1024xf32>
    %3 = tpu.matmul %1, %2, %cst {dimension_numbers = #tpu.dot_dimension_numbers<[1], [0], [0], [1], [0, 0, 1, 1], [], []>} : vector<16x32xbf16>, vector<32x1024xbf16>, vector<16x1024xf32> -> vector<16x1024xf32>
    %c0_3 = arith.constant 0 : index
    %c0_4 = arith.constant 0 : index
    %4 = vector.load %arg3[%c0_3, %c0_4] : memref<1x1024xf32, #tpu.memory_space<vmem>>, vector<1x1024xf32>
    %5 = vector.broadcast %4 : vector<1x1024xf32> to vector<16x1024xf32>
    %6 = arith.addf %3, %5 : vector<16x1024xf32>
    %cst_5 = arith.constant 0.000000e+00 : f32
    %7 = vector.broadcast %cst_5 : f32 to vector<16x1024xf32>
    %8 = arith.maximumf %6, %7 : vector<16x1024xf32>
    %9 = arith.truncf %8 : vector<16x1024xf32> to vector<16x1024xbf16>
    %c0_6 = arith.constant 0 : index
    %c0_7 = arith.constant 0 : index
    %10 = vector.load %arg4[%c0_6, %c0_7] : memref<1024x128xbf16, #tpu.memory_space<vmem>>, vector<1024x128xbf16>
    %cst_8 = arith.constant dense<0.000000e+00> : vector<16x128xf32>
    %11 = tpu.matmul %9, %10, %cst_8 {dimension_numbers = #tpu.dot_dimension_numbers<[1], [0], [0], [1], [0, 0, 1, 1], [], []>} : vector<16x1024xbf16>, vector<1024x128xbf16>, vector<16x128xf32> -> vector<16x128xf32>
    %c0_9 = arith.constant 0 : index
    %c0_10 = arith.constant 0 : index
    %12 = vector.load %arg5[%c0_9, %c0_10] : memref<1x128xf32, #tpu.memory_space<vmem>>, vector<1x128xf32>
    %13 = vector.broadcast %12 : vector<1x128xf32> to vector<16x128xf32>
    %14 = arith.addf %11, %13 : vector<16x128xf32>
    %c0_11 = arith.constant 0 : index
    %c0_12 = arith.constant 0 : index
    %15 = vector.load %arg6[%c0_11, %c0_12] : memref<16x128xf32, #tpu.memory_space<vmem>>, vector<16x128xf32>
    tpu.vector_store %arg6[%c0_11, %c0_12], %14 {strides = array<i32>} : memref<16x128xf32, #tpu.memory_space<vmem>>, vector<16x128xf32>,
    return
  }
  func.func @transform_0(%arg0: i32) -> (i32, i32) {
    %c0_i32 = arith.constant 0 : i32
    %c0_i32_0 = arith.constant 0 : i32
    return %arg0, %c0_i32 : i32, i32
  }
  func.func @transform_1(%arg0: i32) -> (i32, i32) {
    %c0_i32 = arith.constant 0 : i32
    %c0_i32_0 = arith.constant 0 : i32
    %c0_i32_1 = arith.constant 0 : i32
    return %c0_i32, %c0_i32_0 : i32, i32
  }
  func.func @transform_2(%arg0: i32) -> (i32, i32) {
    %c0_i32 = arith.constant 0 : i32
    %c0_i32_0 = arith.constant 0 : i32
    %c0_i32_1 = arith.constant 0 : i32
    return %c0_i32, %c0_i32_0 : i32, i32
  }
  func.func @transform_3(%arg0: i32) -> (i32, i32) {
    %c0_i32 = arith.constant 0 : i32
    %c0_i32_0 = arith.constant 0 : i32
    %c0_i32_1 = arith.constant 0 : i32
    return %c0_i32, %c0_i32_0 : i32, i32
  }
  func.func @transform_4(%arg0: i32) -> (i32, i32) {
    %c0_i32 = arith.constant 0 : i32
    %c0_i32_0 = arith.constant 0 : i32
    %c0_i32_1 = arith.constant 0 : i32
    return %c0_i32, %c0_i32_0 : i32, i32
  }
  func.func @transform_5(%arg0: i32) -> (i32, i32) {
    %c0_i32 = arith.constant 0 : i32
    %c0_i32_0 = arith.constant 0 : i32
    return %arg0, %c0_i32 : i32, i32
  }
}

</mosaic_0001>

<llo_original>
// kernel: prediction_model_forward.1
$region0: #{prediction_model_forward.1}
  #allocation0 [shape = 'u32[]', space=smem, size = 0x4, offset = 0x4, fixed_abs, tag = 'smem constant byte address 0x4 - core index']
  #allocation1 [shape = 'u32[144,128]{1,0:T(1,128)}', space=vmem, size = 0x12000, scoped, tag = 'internal scratch']
  %s0 = inlined_call_operand.hbm [shape: f32[16,32], index: 0, kind: input, shape index: {}]
  %s1 = inlined_call_operand.hbm [shape: bf16[32,1024], index: 1, kind: input, shape index: {}]
  %s2 = inlined_call_operand.hbm [shape: f32[1,1024], index: 2, kind: input, shape index: {}]
  %s3 = inlined_call_operand.hbm [shape: bf16[1024,128], index: 3, kind: input, shape index: {}]
  %s4 = inlined_call_operand.vmem [shape: f32[1,128], index: 4, kind: input, shape index: {}]
  %s5 = inlined_call_operand.vmem [shape: f32[16,128], index: 5, kind: output, shape index: {}]
  %s6 = sld [smem:[#allocation0]]
  $region46: #{prediction_model_forward.1} parent=0
    _
  %s8 = ssub.s32 1, %s6
  %s9 = scalar_select 0, %s8, %s6
  $region1: #{prediction_model_forward.1} parent=0
    #allocation2 [shape = 'u8[8192]{0}', space=vmem, size = 0x2000, scoped, tag = 'input window, operand 0, single buffered']
    #allocation3 [shape = 's32[1]{0}', space=sflag, size = 0x4, scoped, tag = 'scoped memory for prediction_model_forward.1']
    #allocation4 [shape = 'u8[65536]{0}', space=vmem, size = 0x10000, scoped, tag = 'input window, operand 1, single buffered']
    #allocation5 [shape = 's32[1]{0}', space=sflag, size = 0x4, scoped, tag = 'scoped memory for prediction_model_forward.1']
    #allocation6 [shape = 'u8[4096]{0}', space=vmem, size = 0x1000, scoped, tag = 'input window, operand 2, single buffered']
    #allocation7 [shape = 'u8[262144]{0}', space=vmem, size = 0x40000, scoped, tag = 'input window, operand 3, single buffered']
    #allocation8 [shape = 's32[1]{0}', space=sflag, size = 0x4, scoped, tag = 'scoped memory for prediction_model_forward.1']
    %10 = vsyncpa [#allocation3], 0
    %11 = vsyncpa [#allocation5], 0
    %12 = vsyncpa [#allocation8], 0
    // Predicated region
    $region2: #{prediction_model_forward.1} parent=1 // pred_check
      _
    $region3: #{prediction_model_forward.1} parent=1 // pred_check_branch
      %14 = sbr.rel (0) target = $region5
    $region4: #{prediction_model_forward.1} parent=1 // pred_region
      %s16 = ssub.s32 256, 256
      %17 = vsyncadd [#allocation3], %s16
      %s18 = sshll.u32 [#allocation2], 4
      %s19 = int_to_ptr.vmem [resolvable:$true] %s18
      %24 = dma.hbm_to_vmem [thread:$0]  %s0, 256, %s19, [#allocation3], 128, 128, 8
    $region5: #{prediction_model_forward.1} parent=1 // pred_fallthru
      _
    // Predicated region
    $region6: #{prediction_model_forward.1} parent=1 // pred_check
      _
    $region7: #{prediction_model_forward.1} parent=1 // pred_check_branch
      %26 = sbr.rel (0) target = $region9
    $region8: #{prediction_model_forward.1} parent=1 // pred_region
      %s28 = ssub.s32 2048, 2048
      %29 = vsyncadd [#allocation5], %s28
      %s30 = sshll.u32 [#allocation4], 4
      %s31 = int_to_ptr.vmem [resolvable:$true] %s30
      %36 = dma.hbm_to_vmem [thread:$0]  %s1, 2048, %s31, [#allocation5], 512, 512, 32
    $region9: #{prediction_model_forward.1} parent=1 // pred_fallthru
      _
    // Predicated region
    $region10: #{prediction_model_forward.1} parent=1 // pred_check
      _
    $region11: #{prediction_model_forward.1} parent=1 // pred_check_branch
      %38 = sbr.rel (0) target = $region13
    $region12: #{prediction_model_forward.1} parent=1 // pred_region
      %s40 = ssub.s32 128, 128
      %41 = vsyncadd [#allocation5], %s40
      %s43 = sshll.u32 [#allocation6], 4
      %s44 = int_to_ptr.vmem [resolvable:$true] %s43
      %46 = dma.hbm_to_vmem [thread:$0]  %s2, 128, %s44, [#allocation5]
    $region13: #{prediction_model_forward.1} parent=1 // pred_fallthru
      _
    // Predicated region
    $region14: #{prediction_model_forward.1} parent=1 // pred_check
      _
    $region15: #{prediction_model_forward.1} parent=1 // pred_check_branch
      %48 = sbr.rel (0) target = $region17
    $region16: #{prediction_model_forward.1} parent=1 // pred_region
      %s50 = ssub.s32 8192, 8192
      %51 = vsyncadd [#allocation8], %s50
      %s52 = sshll.u32 [#allocation7], 4
      %s53 = int_to_ptr.vmem [resolvable:$true] %s52
      %58 = dma.hbm_to_vmem [thread:$0]  %s3, 8192, %s53, [#allocation8], 64, 64, 4
    $region17: #{prediction_model_forward.1} parent=1 // pred_fallthru
      _
    // Predicated region
    $region18: #{prediction_model_forward.1} parent=1 // pred_check
      _
    $region19: #{prediction_model_forward.1} parent=1 // pred_check_branch
      %60 = sbr.rel (0) target = $region21
    $region20: #{prediction_model_forward.1} parent=1 // pred_region
      _
    $region21: #{prediction_model_forward.1} parent=1 // pred_fallthru
      _
    // Predicated region
    $region22: #{prediction_model_forward.1} parent=1 // pred_check
      _
    $region23: #{prediction_model_forward.1} parent=1 // pred_check_branch
      %62 = sbr.rel (0) target = $region25
    $region24: #{prediction_model_forward.1} parent=1 // pred_region
      %63 = dma.done [#allocation3], 256
    $region25: #{prediction_model_forward.1} parent=1 // pred_fallthru
      _
    // Predicated region
    $region26: #{prediction_model_forward.1} parent=1 // pred_check
      _
    $region27: #{prediction_model_forward.1} parent=1 // pred_check_branch
      %65 = sbr.rel (0) target = $region29
    $region28: #{prediction_model_forward.1} parent=1 // pred_region
      %66 = dma.done [#allocation5], 2048
    $region29: #{prediction_model_forward.1} parent=1 // pred_fallthru
      _
    // Predicated region
    $region30: #{prediction_model_forward.1} parent=1 // pred_check
      _
    $region31: #{prediction_model_forward.1} parent=1 // pred_check_branch
      %68 = sbr.rel (0) target = $region33
    $region32: #{prediction_model_forward.1} parent=1 // pred_region
      %69 = dma.done [#allocation5], 128
    $region33: #{prediction_model_forward.1} parent=1 // pred_fallthru
      _
    // Predicated region
    $region34: #{prediction_model_forward.1} parent=1 // pred_check
      _
    $region35: #{prediction_model_forward.1} parent=1 // pred_check_branch
      %71 = sbr.rel (0) target = $region37
    $region36: #{prediction_model_forward.1} parent=1 // pred_region
      %72 = dma.done [#allocation8], 8192
    $region37: #{prediction_model_forward.1} parent=1 // pred_fallthru
      _
    %v74 = vld [vmem:[#allocation2] sm:$0xff]
    %v75 = vld [vmem:[#allocation2 + $0x8] sm:$0xff]
    %v76 = vpack.c.bf16 %v75, %v74
    %v77 = vld [vmem:[#allocation4] sm:$0xff]
    %v78 = vld [vmem:[#allocation4 + $0x8] sm:$0xff]
    %v79 = vld [vmem:[#allocation4 + $0x10] sm:$0xff]
    %v80 = vld [vmem:[#allocation4 + $0x18] sm:$0xff]
    %v81 = vld [vmem:[#allocation4 + $0x20] sm:$0xff]
    %v82 = vld [vmem:[#allocation4 + $0x28] sm:$0xff]
    %v83 = vld [vmem:[#allocation4 + $0x30] sm:$0xff]
    %v84 = vld [vmem:[#allocation4 + $0x38] sm:$0xff]
    %v85 = vld [vmem:[#allocation4 + $0x40] sm:$0xff]
    %v86 = vld [vmem:[#allocation4 + $0x48] sm:$0xff]
    %v87 = vld [vmem:[#allocation4 + $0x50] sm:$0xff]
    %v88 = vld [vmem:[#allocation4 + $0x58] sm:$0xff]
    %v89 = vld [vmem:[#allocation4 + $0x60] sm:$0xff]
    %v90 = vld [vmem:[#allocation4 + $0x68] sm:$0xff]
    %v91 = vld [vmem:[#allocation4 + $0x70] sm:$0xff]
    %v92 = vld [vmem:[#allocation4 + $0x78] sm:$0xff]
    %v93 = vld [vmem:[#allocation6] sm:$0xff]
    %v95 = vlaneseq
    %v96 = vshrl.u32 %v95, 7
    %v97 = vsub.s32 0, %v96
    %v98 = vrot.slane %v93, %v97
    %v99 = vlaneseq
    %v100 = vshrl.u32 %v99, 7
    %v101 = vsub.s32 1, %v100
    %v102 = vrot.slane %v93, %v101
    %v103 = vlaneseq
    %v104 = vshrl.u32 %v103, 7
    %v105 = vsub.s32 2, %v104
    %v106 = vrot.slane %v93, %v105
    %v107 = vlaneseq
    %v108 = vshrl.u32 %v107, 7
    %v109 = vsub.s32 3, %v108
    %v110 = vrot.slane %v93, %v109
    %v111 = vlaneseq
    %v112 = vshrl.u32 %v111, 7
    %v113 = vsub.s32 4, %v112
    %v114 = vrot.slane %v93, %v113
    %v115 = vlaneseq
    %v116 = vshrl.u32 %v115, 7
    %v117 = vsub.s32 5, %v116
    %v118 = vrot.slane %v93, %v117
    %v119 = vlaneseq
    %v120 = vshrl.u32 %v119, 7
    %v121 = vsub.s32 6, %v120
    %v122 = vrot.slane %v93, %v121
    %v123 = vlaneseq
    %v124 = vshrl.u32 %v123, 7
    %v125 = vsub.s32 7, %v124
    %v126 = vrot.slane %v93, %v125
    %v151 = vunpack.c.l.b16 %v77
    %v152 = vunpack.c.h.b16 %v77
    %v153 = vunpack.c.l.b16 %v78
    %v154 = vunpack.c.h.b16 %v78
    %v155 = vunpack.c.l.b16 %v79
    %v156 = vunpack.c.h.b16 %v79
    %v157 = vunpack.c.l.b16 %v80
    %v158 = vunpack.c.h.b16 %v80
    %v159 = vunpack.c.l.b16 %v81
    %v160 = vunpack.c.h.b16 %v81
    %v161 = vunpack.c.l.b16 %v82
    %v162 = vunpack.c.h.b16 %v82
    %v163 = vunpack.c.l.b16 %v83
    %v164 = vunpack.c.h.b16 %v83
    %v165 = vunpack.c.l.b16 %v84
    %v166 = vunpack.c.h.b16 %v84
    %v167 = vunpack.c.l.b16 %v85
    %v168 = vunpack.c.h.b16 %v85
    %v169 = vunpack.c.l.b16 %v86
    %v170 = vunpack.c.h.b16 %v86
    %v171 = vunpack.c.l.b16 %v87
    %v172 = vunpack.c.h.b16 %v87
    %v173 = vunpack.c.l.b16 %v88
    %v174 = vunpack.c.h.b16 %v88
    %v175 = vunpack.c.l.b16 %v89
    %v176 = vunpack.c.h.b16 %v89
    %v177 = vunpack.c.l.b16 %v90
    %v178 = vunpack.c.h.b16 %v90
    %v179 = vunpack.c.l.b16 %v91
    %v180 = vunpack.c.h.b16 %v91
    %v181 = vunpack.c.l.b16 %v92
    %v182 = vunpack.c.h.b16 %v92
    %v183 = vpack.c.b16 %v159, %v151
    %v184 = vpack.c.b16 %v160, %v152
    %v185 = vpack.c.b16 %v161, %v153
    %v186 = vpack.c.b16 %v162, %v154
    %v187 = vpack.c.b16 %v163, %v155
    %v188 = vpack.c.b16 %v164, %v156
    %v189 = vpack.c.b16 %v165, %v157
    %v190 = vpack.c.b16 %v166, %v158
    %v191 = vpack.c.b16 %v175, %v167
    %v192 = vpack.c.b16 %v176, %v168
    %v193 = vpack.c.b16 %v177, %v169
    %v194 = vpack.c.b16 %v178, %v170
    %v195 = vpack.c.b16 %v179, %v171
    %v196 = vpack.c.b16 %v180, %v172
    %v197 = vpack.c.b16 %v181, %v173
    %v198 = vpack.c.b16 %v182, %v174
    %vm215 = vcmask 261120
    %v217 = vsel %vm215, %v76, 0
    %219 = vmatprep.subr.bf16.mxu0 %v184
    %220 = vmatpush1.bf16.msra.mxu0 %v183
    %221 = vmatprep.subr.bf16.mxu0 %v192
    %222 = vmatpush1.bf16.msra.mxu0 %v191
    %223 = vmatprep.subr.bf16.mxu0 0
    %224 = vmatpush1.bf16.msra.mxu0 0
    %225 = vmatprep.subr.bf16.mxu0 0
    %226 = vmatpush1.bf16.msra.mxu0 0
    %227 = vmatprep.subr.bf16.mxu0 0
    %228 = vmatpush1.bf16.msra.mxu0 0
    %229 = vmatprep.subr.bf16.mxu0 0
    %230 = vmatpush1.bf16.msra.mxu0 0
    %231 = vmatprep.subr.bf16.mxu0 0
    %232 = vmatpush1.bf16.msra.mxu0 0
    %233 = vmatprep.subr.bf16.mxu0 0
    %234 = vmatpush1.bf16.msra.mxu0 0
    %235 = vmatprep.subr.bf16.mxu0 0
    %236 = vmatpush1.bf16.msra.mxu0 0
    %237 = vmatprep.subr.bf16.mxu0 0
    %238 = vmatpush1.bf16.msra.mxu0 0
    %239 = vmatprep.subr.bf16.mxu0 0
    %240 = vmatpush1.bf16.msra.mxu0 0
    %241 = vmatprep.subr.bf16.mxu0 0
    %242 = vmatpush1.bf16.msra.mxu0 0
    %243 = vmatprep.subr.bf16.mxu0 0
    %244 = vmatpush1.bf16.msra.mxu0 0
    %245 = vmatprep.subr.bf16.mxu0 0
    %246 = vmatpush1.bf16.msra.mxu0 0
    %247 = vmatprep.subr.bf16.mxu0 0
    %248 = vmatpush1.bf16.msra.mxu0 0
    %249 = vmatprep.subr.bf16.mxu0 0
    %250 = vmatpush1.bf16.msra.mxu0 0
    %251 = vmatprep.mubr.bf16.mxu0 0
    %252 = vmatmul.mubr.bf16.gmra.mrb[0].mxu0 %v217
    %v253 = vpop.f32.mrb[0].mxu0
    %v254 = vadd.f32 %v98, %v253
    %v255 = vpop.f32.mrb[0].mxu0
    %v256 = vadd.f32 %v102, %v255
    %v257 = vpop.f32.mrb[0].mxu0
    %v258 = vadd.f32 %v98, %v257
    %v259 = vpop.f32.mrb[0].mxu0
    %v260 = vadd.f32 %v102, %v259
    %261 = vdwg.mxu0
    %262 = vmatprep.subr.bf16.mxu0 %v186
    %263 = vmatpush1.bf16.msra.mxu0 %v185
    %264 = vmatprep.subr.bf16.mxu0 %v194
    %265 = vmatpush1.bf16.msra.mxu0 %v193
    %266 = vmatprep.subr.bf16.mxu0 0
    %267 = vmatpush1.bf16.msra.mxu0 0
    %268 = vmatprep.subr.bf16.mxu0 0
    %269 = vmatpush1.bf16.msra.mxu0 0
    %270 = vmatprep.subr.bf16.mxu0 0
    %271 = vmatpush1.bf16.msra.mxu0 0
    %272 = vmatprep.subr.bf16.mxu0 0
    %273 = vmatpush1.bf16.msra.mxu0 0
    %274 = vmatprep.subr.bf16.mxu0 0
    %275 = vmatpush1.bf16.msra.mxu0 0
    %276 = vmatprep.subr.bf16.mxu0 0
    %277 = vmatpush1.bf16.msra.mxu0 0
    %278 = vmatprep.subr.bf16.mxu0 0
    %279 = vmatpush1.bf16.msra.mxu0 0
    %280 = vmatprep.subr.bf16.mxu0 0
    %281 = vmatpush1.bf16.msra.mxu0 0
    %282 = vmatprep.subr.bf16.mxu0 0
    %283 = vmatpush1.bf16.msra.mxu0 0
    %284 = vmatprep.subr.bf16.mxu0 0
    %285 = vmatpush1.bf16.msra.mxu0 0
    %286 = vmatprep.subr.bf16.mxu0 0
    %287 = vmatpush1.bf16.msra.mxu0 0
    %288 = vmatprep.subr.bf16.mxu0 0
    %289 = vmatpush1.bf16.msra.mxu0 0
    %290 = vmatprep.subr.bf16.mxu0 0
    %291 = vmatpush1.bf16.msra.mxu0 0
    %292 = vmatprep.subr.bf16.mxu0 0
    %293 = vmatpush1.bf16.msra.mxu0 0
    %294 = vmatprep.mubr.bf16.mxu0 0
    %295 = vmatmul.mubr.bf16.gmra.mrb[0].mxu0 %v217
    %v296 = vpop.f32.mrb[0].mxu0
    %v297 = vadd.f32 %v106, %v296
    %v298 = vpop.f32.mrb[0].mxu0
    %v299 = vadd.f32 %v110, %v298
    %v300 = vpop.f32.mrb[0].mxu0
    %v301 = vadd.f32 %v106, %v300
    %v302 = vpop.f32.mrb[0].mxu0
    %v303 = vadd.f32 %v110, %v302
    %304 = vdwg.mxu0
    %305 = vmatprep.subr.bf16.mxu0 %v188
    %306 = vmatpush1.bf16.msra.mxu0 %v187
    %307 = vmatprep.subr.bf16.mxu0 %v196
    %308 = vmatpush1.bf16.msra.mxu0 %v195
    %309 = vmatprep.subr.bf16.mxu0 0
    %310 = vmatpush1.bf16.msra.mxu0 0
    %311 = vmatprep.subr.bf16.mxu0 0
    %312 = vmatpush1.bf16.msra.mxu0 0
    %313 = vmatprep.subr.bf16.mxu0 0
    %314 = vmatpush1.bf16.msra.mxu0 0
    %315 = vmatprep.subr.bf16.mxu0 0
    %316 = vmatpush1.bf16.msra.mxu0 0
    %317 = vmatprep.subr.bf16.mxu0 0
    %318 = vmatpush1.bf16.msra.mxu0 0
    %319 = vmatprep.subr.bf16.mxu0 0
    %320 = vmatpush1.bf16.msra.mxu0 0
    %321 = vmatprep.subr.bf16.mxu0 0
    %322 = vmatpush1.bf16.msra.mxu0 0
    %323 = vmatprep.subr.bf16.mxu0 0
    %324 = vmatpush1.bf16.msra.mxu0 0
    %325 = vmatprep.subr.bf16.mxu0 0
    %326 = vmatpush1.bf16.msra.mxu0 0
    %327 = vmatprep.subr.bf16.mxu0 0
    %328 = vmatpush1.bf16.msra.mxu0 0
    %329 = vmatprep.subr.bf16.mxu0 0
    %330 = vmatpush1.bf16.msra.mxu0 0
    %331 = vmatprep.subr.bf16.mxu0 0
    %332 = vmatpush1.bf16.msra.mxu0 0
    %333 = vmatprep.subr.bf16.mxu0 0
    %334 = vmatpush1.bf16.msra.mxu0 0
    %335 = vmatprep.subr.bf16.mxu0 0
    %336 = vmatpush1.bf16.msra.mxu0 0
    %337 = vmatprep.mubr.bf16.mxu0 0
    %338 = vmatmul.mubr.bf16.gmra.mrb[0].mxu0 %v217
    %v339 = vpop.f32.mrb[0].mxu0
    %v340 = vadd.f32 %v114, %v339
    %v341 = vpop.f32.mrb[0].mxu0
    %v342 = vadd.f32 %v118, %v341
    %v343 = vpop.f32.mrb[0].mxu0
    %v344 = vadd.f32 %v114, %v343
    %v345 = vpop.f32.mrb[0].mxu0
    %v346 = vadd.f32 %v118, %v345
    %347 = vdwg.mxu0
    %348 = vmatprep.subr.bf16.mxu0 %v190
    %349 = vmatpush1.bf16.msra.mxu0 %v189
    %350 = vmatprep.subr.bf16.mxu0 %v198
    %351 = vmatpush1.bf16.msra.mxu0 %v197
    %352 = vmatprep.subr.bf16.mxu0 0
    %353 = vmatpush1.bf16.msra.mxu0 0
    %354 = vmatprep.subr.bf16.mxu0 0
    %355 = vmatpush1.bf16.msra.mxu0 0
    %356 = vmatprep.subr.bf16.mxu0 0
    %357 = vmatpush1.bf16.msra.mxu0 0
    %358 = vmatprep.subr.bf16.mxu0 0
    %359 = vmatpush1.bf16.msra.mxu0 0
    %360 = vmatprep.subr.bf16.mxu0 0
    %361 = vmatpush1.bf16.msra.mxu0 0
    %362 = vmatprep.subr.bf16.mxu0 0
    %363 = vmatpush1.bf16.msra.mxu0 0
    %364 = vmatprep.subr.bf16.mxu0 0
    %365 = vmatpush1.bf16.msra.mxu0 0
    %366 = vmatprep.subr.bf16.mxu0 0
    %367 = vmatpush1.bf16.msra.mxu0 0
    %368 = vmatprep.subr.bf16.mxu0 0
    %369 = vmatpush1.bf16.msra.mxu0 0
    %370 = vmatprep.subr.bf16.mxu0 0
    %371 = vmatpush1.bf16.msra.mxu0 0
    %372 = vmatprep.subr.bf16.mxu0 0
    %373 = vmatpush1.bf16.msra.mxu0 0
    %374 = vmatprep.subr.bf16.mxu0 0
    %375 = vmatpush1.bf16.msra.mxu0 0
    %376 = vmatprep.subr.bf16.mxu0 0
    %377 = vmatpush1.bf16.msra.mxu0 0
    %378 = vmatprep.subr.bf16.mxu0 0
    %379 = vmatpush1.bf16.msra.mxu0 0
    %380 = vmatprep.mubr.bf16.mxu0 0
    %381 = vmatmul.mubr.bf16.gmra.mrb[0].mxu0 %v217
    %v382 = vpop.f32.mrb[0].mxu0
    %v383 = vadd.f32 %v122, %v382
    %v384 = vpop.f32.mrb[0].mxu0
    %v385 = vadd.f32 %v126, %v384
    %v386 = vpop.f32.mrb[0].mxu0
    %v387 = vadd.f32 %v122, %v386
    %v388 = vpop.f32.mrb[0].mxu0
    %v389 = vadd.f32 %v126, %v388
    %390 = vdwg.mxu0
    %v391 = vmax.f32 %v254, 0.0
    %v392 = vmax.f32 %v256, 0.0
    %v393 = vmax.f32 %v297, 0.0
    %v394 = vmax.f32 %v299, 0.0
    %v395 = vmax.f32 %v340, 0.0
    %v396 = vmax.f32 %v342, 0.0
    %v397 = vmax.f32 %v383, 0.0
    %v398 = vmax.f32 %v385, 0.0
    %v399 = vmax.f32 %v258, 0.0
    %v400 = vmax.f32 %v260, 0.0
    %v401 = vmax.f32 %v301, 0.0
    %v402 = vmax.f32 %v303, 0.0
    %v403 = vmax.f32 %v344, 0.0
    %v404 = vmax.f32 %v346, 0.0
    %v405 = vmax.f32 %v387, 0.0
    %v406 = vmax.f32 %v389, 0.0
    %v407 = vpack.c.bf16 %v399, %v391
    %v408 = vpack.c.bf16 %v400, %v392
    %v409 = vpack.c.bf16 %v401, %v393
    %v410 = vpack.c.bf16 %v402, %v394
    %v411 = vpack.c.bf16 %v403, %v395
    %v412 = vpack.c.bf16 %v404, %v396
    %v413 = vpack.c.bf16 %v405, %v397
    %v414 = vpack.c.bf16 %v406, %v398
    %v415 = vld [vmem:[#allocation7] sm:$0xf]
    %v416 = vld [vmem:[#allocation7 + $0x4] sm:$0xf]
    %v417 = vld [vmem:[#allocation7 + $0x8] sm:$0xf]
    %v418 = vld [vmem:[#allocation7 + $0xc] sm:$0xf]
    %v419 = vld [vmem:[#allocation7 + $0x10] sm:$0xf]
    %v420 = vld [vmem:[#allocation7 + $0x14] sm:$0xf]
    %v421 = vld [vmem:[#allocation7 + $0x18] sm:$0xf]
    %v422 = vld [vmem:[#allocation7 + $0x1c] sm:$0xf]
    %v423 = vld [vmem:[#allocation7 + $0x20] sm:$0xf]
    %v424 = vld [vmem:[#allocation7 + $0x24] sm:$0xf]
    %v425 = vld [vmem:[#allocation7 + $0x28] sm:$0xf]
    %v426 = vld [vmem:[#allocation7 + $0x2c] sm:$0xf]
    %v427 = vld [vmem:[#allocation7 + $0x30] sm:$0xf]
    %v428 = vld [vmem:[#allocation7 + $0x34] sm:$0xf]
    %v429 = vld [vmem:[#allocation7 + $0x38] sm:$0xf]
    %v430 = vld [vmem:[#allocation7 + $0x3c] sm:$0xf]
    %v431 = vld [vmem:[#allocation7 + $0x40] sm:$0xf]
    %v432 = vld [vmem:[#allocation7 + $0x44] sm:$0xf]
    %v433 = vld [vmem:[#allocation7 + $0x48] sm:$0xf]
    %v434 = vld [vmem:[#allocation7 + $0x4c] sm:$0xf]
    %v435 = vld [vmem:[#allocation7 + $0x50] sm:$0xf]
    %v436 = vld [vmem:[#allocation7 + $0x54] sm:$0xf]
    %v437 = vld [vmem:[#allocation7 + $0x58] sm:$0xf]
    %v438 = vld [vmem:[#allocation7 + $0x5c] sm:$0xf]
    %v439 = vld [vmem:[#allocation7 + $0x60] sm:$0xf]
    %v440 = vld [vmem:[#allocation7 + $0x64] sm:$0xf]
    %v441 = vld [vmem:[#allocation7 + $0x68] sm:$0xf]
    %v442 = vld [vmem:[#allocation7 + $0x6c] sm:$0xf]
    %v443 = vld [vmem:[#allocation7 + $0x70] sm:$0xf]
    %v444 = vld [vmem:[#allocation7 + $0x74] sm:$0xf]
    %v445 = vld [vmem:[#allocation7 + $0x78] sm:$0xf]
    %v446 = vld [vmem:[#allocation7 + $0x7c] sm:$0xf]
    %v447 = vld [vmem:[#allocation7 + $0x80] sm:$0xf]
    %v448 = vld [vmem:[#allocation7 + $0x84] sm:$0xf]
    %v449 = vld [vmem:[#allocation7 + $0x88] sm:$0xf]
    %v450 = vld [vmem:[#allocation7 + $0x8c] sm:$0xf]
    %v451 = vld [vmem:[#allocation7 + $0x90] sm:$0xf]
    %v452 = vld [vmem:[#allocation7 + $0x94] sm:$0xf]
    %v453 = vld [vmem:[#allocation7 + $0x98] sm:$0xf]
    %v454 = vld [vmem:[#allocation7 + $0x9c] sm:$0xf]
    %v455 = vld [vmem:[#allocation7 + $0xa0] sm:$0xf]
    %v456 = vld [vmem:[#allocation7 + $0xa4] sm:$0xf]
    %v457 = vld [vmem:[#allocation7 + $0xa8] sm:$0xf]
    %v458 = vld [vmem:[#allocation7 + $0xac] sm:$0xf]
    %v459 = vld [vmem:[#allocation7 + $0xb0] sm:$0xf]
    %v460 = vld [vmem:[#allocation7 + $0xb4] sm:$0xf]
    %v461 = vld [vmem:[#allocation7 + $0xb8] sm:$0xf]
    %v462 = vld [vmem:[#allocation7 + $0xbc] sm:$0xf]
    %v463 = vld [vmem:[#allocation7 + $0xc0] sm:$0xf]
    %v464 = vld [vmem:[#allocation7 + $0xc4] sm:$0xf]
    %v465 = vld [vmem:[#allocation7 + $0xc8] sm:$0xf]
    %v466 = vld [vmem:[#allocation7 + $0xcc] sm:$0xf]
    %v467 = vld [vmem:[#allocation7 + $0xd0] sm:$0xf]
    %v468 = vld [vmem:[#allocation7 + $0xd4] sm:$0xf]
    %v469 = vld [vmem:[#allocation7 + $0xd8] sm:$0xf]
    %v470 = vld [vmem:[#allocation7 + $0xdc] sm:$0xf]
    %v471 = vld [vmem:[#allocation7 + $0xe0] sm:$0xf]
    %v472 = vld [vmem:[#allocation7 + $0xe4] sm:$0xf]
    %v473 = vld [vmem:[#allocation7 + $0xe8] sm:$0xf]
    %v474 = vld [vmem:[#allocation7 + $0xec] sm:$0xf]
    %v475 = vld [vmem:[#allocation7 + $0xf0] sm:$0xf]
    %v476 = vld [vmem:[#allocation7 + $0xf4] sm:$0xf]
    %v477 = vld [vmem:[#allocation7 + $0xf8] sm:$0xf]
    %v478 = vld [vmem:[#allocation7 + $0xfc] sm:$0xf]
    %v479 = vld [vmem:[#allocation7 + $0x100] sm:$0xf]
    %v480 = vld [vmem:[#allocation7 + $0x104] sm:$0xf]
    %v481 = vld [vmem:[#allocation7 + $0x108] sm:$0xf]
    %v482 = vld [vmem:[#allocation7 + $0x10c] sm:$0xf]
    %v483 = vld [vmem:[#allocation7 + $0x110] sm:$0xf]
    %v484 = vld [vmem:[#allocation7 + $0x114] sm:$0xf]
    %v485 = vld [vmem:[#allocation7 + $0x118] sm:$0xf]
    %v486 = vld [vmem:[#allocation7 + $0x11c] sm:$0xf]
    %v487 = vld [vmem:[#allocation7 + $0x120] sm:$0xf]
    %v488 = vld [vmem:[#allocation7 + $0x124] sm:$0xf]
    %v489 = vld [vmem:[#allocation7 + $0x128] sm:$0xf]
    %v490 = vld [vmem:[#allocation7 + $0x12c] sm:$0xf]
    %v491 = vld [vmem:[#allocation7 + $0x130] sm:$0xf]
    %v492 = vld [vmem:[#allocation7 + $0x134] sm:$0xf]
    %v493 = vld [vmem:[#allocation7 + $0x138] sm:$0xf]
    %v494 = vld [vmem:[#allocation7 + $0x13c] sm:$0xf]
    %v495 = vld [vmem:[#allocation7 + $0x140] sm:$0xf]
    %v496 = vld [vmem:[#allocation7 + $0x144] sm:$0xf]
    %v497 = vld [vmem:[#allocation7 + $0x148] sm:$0xf]
    %v498 = vld [vmem:[#allocation7 + $0x14c] sm:$0xf]
    %v499 = vld [vmem:[#allocation7 + $0x150] sm:$0xf]
    %v500 = vld [vmem:[#allocation7 + $0x154] sm:$0xf]
    %v501 = vld [vmem:[#allocation7 + $0x158] sm:$0xf]
    %v502 = vld [vmem:[#allocation7 + $0x15c] sm:$0xf]
    %v503 = vld [vmem:[#allocation7 + $0x160] sm:$0xf]
    %v504 = vld [vmem:[#allocation7 + $0x164] sm:$0xf]
    %v505 = vld [vmem:[#allocation7 + $0x168] sm:$0xf]
    %v506 = vld [vmem:[#allocation7 + $0x16c] sm:$0xf]
    %v507 = vld [vmem:[#allocation7 + $0x170] sm:$0xf]
    %v508 = vld [vmem:[#allocation7 + $0x174] sm:$0xf]
    %v509 = vld [vmem:[#allocation7 + $0x178] sm:$0xf]
    %v510 = vld [vmem:[#allocation7 + $0x17c] sm:$0xf]
    %v511 = vld [vmem:[#allocation7 + $0x180] sm:$0xf]
    %v512 = vld [vmem:[#allocation7 + $0x184] sm:$0xf]
    %v513 = vld [vmem:[#allocation7 + $0x188] sm:$0xf]
    %v514 = vld [vmem:[#allocation7 + $0x18c] sm:$0xf]
    %v515 = vld [vmem:[#allocation7 + $0x190] sm:$0xf]
    %v516 = vld [vmem:[#allocation7 + $0x194] sm:$0xf]
    %v517 = vld [vmem:[#allocation7 + $0x198] sm:$0xf]
    %v518 = vld [vmem:[#allocation7 + $0x19c] sm:$0xf]
    %v519 = vld [vmem:[#allocation7 + $0x1a0] sm:$0xf]
    %v520 = vld [vmem:[#allocation7 + $0x1a4] sm:$0xf]
    %v521 = vld [vmem:[#allocation7 + $0x1a8] sm:$0xf]
    %v522 = vld [vmem:[#allocation7 + $0x1ac] sm:$0xf]
    %v523 = vld [vmem:[#allocation7 + $0x1b0] sm:$0xf]
    %v524 = vld [vmem:[#allocation7 + $0x1b4] sm:$0xf]
    %v525 = vld [vmem:[#allocation7 + $0x1b8] sm:$0xf]
    %v526 = vld [vmem:[#allocation7 + $0x1bc] sm:$0xf]
    %v527 = vld [vmem:[#allocation7 + $0x1c0] sm:$0xf]
    %v528 = vld [vmem:[#allocation7 + $0x1c4] sm:$0xf]
    %v529 = vld [vmem:[#allocation7 + $0x1c8] sm:$0xf]
    %v530 = vld [vmem:[#allocation7 + $0x1cc] sm:$0xf]
    %v531 = vld [vmem:[#allocation7 + $0x1d0] sm:$0xf]
    %v532 = vld [vmem:[#allocation7 + $0x1d4] sm:$0xf]
    %v533 = vld [vmem:[#allocation7 + $0x1d8] sm:$0xf]
    %v534 = vld [vmem:[#allocation7 + $0x1dc] sm:$0xf]
    %v535 = vld [vmem:[#allocation7 + $0x1e0] sm:$0xf]
    %v536 = vld [vmem:[#allocation7 + $0x1e4] sm:$0xf]
    %v537 = vld [vmem:[#allocation7 + $0x1e8] sm:$0xf]
    %v538 = vld [vmem:[#allocation7 + $0x1ec] sm:$0xf]
    %v539 = vld [vmem:[#allocation7 + $0x1f0] sm:$0xf]
    %v540 = vld [vmem:[#allocation7 + $0x1f4] sm:$0xf]
    %v541 = vld [vmem:[#allocation7 + $0x1f8] sm:$0xf]
    %v542 = vld [vmem:[#allocation7 + $0x1fc] sm:$0xf]
    %v543 = vld [vmem:[%s4] sm:$0x1]
    %v545 = vlaneseq
    %v546 = vshrl.u32 %v545, 7
    %v547 = vsub.s32 0, %v546
    %v548 = vrot.slane %v543, %v547
    %v678 = vunpack.c.l.b16 %v415
    %v679 = vunpack.c.l.b16 %v416
    %v680 = vunpack.c.l.b16 %v417
    %v681 = vunpack.c.l.b16 %v418
    %v682 = vunpack.c.l.b16 %v419
    %v683 = vunpack.c.l.b16 %v420
    %v684 = vunpack.c.l.b16 %v421
    %v685 = vunpack.c.l.b16 %v422
    %v686 = vunpack.c.l.b16 %v423
    %v687 = vunpack.c.l.b16 %v424
    %v688 = vunpack.c.l.b16 %v425
    %v689 = vunpack.c.l.b16 %v426
    %v690 = vunpack.c.l.b16 %v427
    %v691 = vunpack.c.l.b16 %v428
    %v692 = vunpack.c.l.b16 %v429
    %v693 = vunpack.c.l.b16 %v430
    %v694 = vunpack.c.l.b16 %v431
    %v695 = vunpack.c.l.b16 %v432
    %v696 = vunpack.c.l.b16 %v433
    %v697 = vunpack.c.l.b16 %v434
    %v698 = vunpack.c.l.b16 %v435
    %v699 = vunpack.c.l.b16 %v436
    %v700 = vunpack.c.l.b16 %v437
    %v701 = vunpack.c.l.b16 %v438
    %v702 = vunpack.c.l.b16 %v439
    %v703 = vunpack.c.l.b16 %v440
    %v704 = vunpack.c.l.b16 %v441
    %v705 = vunpack.c.l.b16 %v442
    %v706 = vunpack.c.l.b16 %v443
    %v707 = vunpack.c.l.b16 %v444
    %v708 = vunpack.c.l.b16 %v445
    %v709 = vunpack.c.l.b16 %v446
    %v710 = vunpack.c.l.b16 %v447
    %v711 = vunpack.c.l.b16 %v448
    %v712 = vunpack.c.l.b16 %v449
    %v713 = vunpack.c.l.b16 %v450
    %v714 = vunpack.c.l.b16 %v451
    %v715 = vunpack.c.l.b16 %v452
    %v716 = vunpack.c.l.b16 %v453
    %v717 = vunpack.c.l.b16 %v454
    %v718 = vunpack.c.l.b16 %v455
    %v719 = vunpack.c.l.b16 %v456
    %v720 = vunpack.c.l.b16 %v457
    %v721 = vunpack.c.l.b16 %v458
    %v722 = vunpack.c.l.b16 %v459
    %v723 = vunpack.c.l.b16 %v460
    %v724 = vunpack.c.l.b16 %v461
    %v725 = vunpack.c.l.b16 %v462
    %v726 = vunpack.c.l.b16 %v463
    %v727 = vunpack.c.l.b16 %v464
    %v728 = vunpack.c.l.b16 %v465
    %v729 = vunpack.c.l.b16 %v466
    %v730 = vunpack.c.l.b16 %v467
    %v731 = vunpack.c.l.b16 %v468
    %v732 = vunpack.c.l.b16 %v469
    %v733 = vunpack.c.l.b16 %v470
    %v734 = vunpack.c.l.b16 %v471
    %v735 = vunpack.c.l.b16 %v472
    %v736 = vunpack.c.l.b16 %v473
    %v737 = vunpack.c.l.b16 %v474
    %v738 = vunpack.c.l.b16 %v475
    %v739 = vunpack.c.l.b16 %v476
    %v740 = vunpack.c.l.b16 %v477
    %v741 = vunpack.c.l.b16 %v478
    %v742 = vunpack.c.l.b16 %v479
    %v743 = vunpack.c.l.b16 %v480
    %v744 = vunpack.c.l.b16 %v481
    %v745 = vunpack.c.l.b16 %v482
    %v746 = vunpack.c.l.b16 %v483
    %v747 = vunpack.c.l.b16 %v484
    %v748 = vunpack.c.l.b16 %v485
    %v749 = vunpack.c.l.b16 %v486
    %v750 = vunpack.c.l.b16 %v487
    %v751 = vunpack.c.l.b16 %v488
    %v752 = vunpack.c.l.b16 %v489
    %v753 = vunpack.c.l.b16 %v490
    %v754 = vunpack.c.l.b16 %v491
    %v755 = vunpack.c.l.b16 %v492
    %v756 = vunpack.c.l.b16 %v493
    %v757 = vunpack.c.l.b16 %v494
    %v758 = vunpack.c.l.b16 %v495
    %v759 = vunpack.c.l.b16 %v496
    %v760 = vunpack.c.l.b16 %v497
    %v761 = vunpack.c.l.b16 %v498
    %v762 = vunpack.c.l.b16 %v499
    %v763 = vunpack.c.l.b16 %v500
    %v764 = vunpack.c.l.b16 %v501
    %v765 = vunpack.c.l.b16 %v502
    %v766 = vunpack.c.l.b16 %v503
    %v767 = vunpack.c.l.b16 %v504
    %v768 = vunpack.c.l.b16 %v505
    %v769 = vunpack.c.l.b16 %v506
    %v770 = vunpack.c.l.b16 %v507
    %v771 = vunpack.c.l.b16 %v508
    %v772 = vunpack.c.l.b16 %v509
    %v773 = vunpack.c.l.b16 %v510
    %v774 = vunpack.c.l.b16 %v511
    %v775 = vunpack.c.l.b16 %v512
    %v776 = vunpack.c.l.b16 %v513
    %v777 = vunpack.c.l.b16 %v514
    %v778 = vunpack.c.l.b16 %v515
    %v779 = vunpack.c.l.b16 %v516
    %v780 = vunpack.c.l.b16 %v517
    %v781 = vunpack.c.l.b16 %v518
    %v782 = vunpack.c.l.b16 %v519
    %v783 = vunpack.c.l.b16 %v520
    %v784 = vunpack.c.l.b16 %v521
    %v785 = vunpack.c.l.b16 %v522
    %v786 = vunpack.c.l.b16 %v523
    %v787 = vunpack.c.l.b16 %v524
    %v788 = vunpack.c.l.b16 %v525
    %v789 = vunpack.c.l.b16 %v526
    %v790 = vunpack.c.l.b16 %v527
    %v791 = vunpack.c.l.b16 %v528
    %v792 = vunpack.c.l.b16 %v529
    %v793 = vunpack.c.l.b16 %v530
    %v794 = vunpack.c.l.b16 %v531
    %v795 = vunpack.c.l.b16 %v532
    %v796 = vunpack.c.l.b16 %v533
    %v797 = vunpack.c.l.b16 %v534
    %v798 = vunpack.c.l.b16 %v535
    %v799 = vunpack.c.l.b16 %v536
    %v800 = vunpack.c.l.b16 %v537
    %v801 = vunpack.c.l.b16 %v538
    %v802 = vunpack.c.l.b16 %v539
    %v803 = vunpack.c.l.b16 %v540
    %v804 = vunpack.c.l.b16 %v541
    %v805 = vunpack.c.l.b16 %v542
    %v806 = vpack.c.b16 %v679, %v678
    %v807 = vpack.c.b16 %v681, %v680
    %v808 = vpack.c.b16 %v683, %v682
    %v809 = vpack.c.b16 %v685, %v684
    %v810 = vpack.c.b16 %v687, %v686
    %v811 = vpack.c.b16 %v689, %v688
    %v812 = vpack.c.b16 %v691, %v690
    %v813 = vpack.c.b16 %v693, %v692
    %v814 = vpack.c.b16 %v695, %v694
    %v815 = vpack.c.b16 %v697, %v696
    %v816 = vpack.c.b16 %v699, %v698
    %v817 = vpack.c.b16 %v701, %v700
    %v818 = vpack.c.b16 %v703, %v702
    %v819 = vpack.c.b16 %v705, %v704
    %v820 = vpack.c.b16 %v707, %v706
    %v821 = vpack.c.b16 %v709, %v708
    %v822 = vpack.c.b16 %v711, %v710
    %v823 = vpack.c.b16 %v713, %v712
    %v824 = vpack.c.b16 %v715, %v714
    %v825 = vpack.c.b16 %v717, %v716
    %v826 = vpack.c.b16 %v719, %v718
    %v827 = vpack.c.b16 %v721, %v720
    %v828 = vpack.c.b16 %v723, %v722
    %v829 = vpack.c.b16 %v725, %v724
    %v830 = vpack.c.b16 %v727, %v726
    %v831 = vpack.c.b16 %v729, %v728
    %v832 = vpack.c.b16 %v731, %v730
    %v833 = vpack.c.b16 %v733, %v732
    %v834 = vpack.c.b16 %v735, %v734
    %v835 = vpack.c.b16 %v737, %v736
    %v836 = vpack.c.b16 %v739, %v738
    %v837 = vpack.c.b16 %v741, %v740
    %v838 = vpack.c.b16 %v743, %v742
    %v839 = vpack.c.b16 %v745, %v744
    %v840 = vpack.c.b16 %v747, %v746
    %v841 = vpack.c.b16 %v749, %v748
    %v842 = vpack.c.b16 %v751, %v750
    %v843 = vpack.c.b16 %v753, %v752
    %v844 = vpack.c.b16 %v755, %v754
    %v845 = vpack.c.b16 %v757, %v756
    %v846 = vpack.c.b16 %v759, %v758
    %v847 = vpack.c.b16 %v761, %v760
    %v848 = vpack.c.b16 %v763, %v762
    %v849 = vpack.c.b16 %v765, %v764
    %v850 = vpack.c.b16 %v767, %v766
    %v851 = vpack.c.b16 %v769, %v768
    %v852 = vpack.c.b16 %v771, %v770
    %v853 = vpack.c.b16 %v773, %v772
    %v854 = vpack.c.b16 %v775, %v774
    %v855 = vpack.c.b16 %v777, %v776
    %v856 = vpack.c.b16 %v779, %v778
    %v857 = vpack.c.b16 %v781, %v780
    %v858 = vpack.c.b16 %v783, %v782
    %v859 = vpack.c.b16 %v785, %v784
    %v860 = vpack.c.b16 %v787, %v786
    %v861 = vpack.c.b16 %v789, %v788
    %v862 = vpack.c.b16 %v791, %v790
    %v863 = vpack.c.b16 %v793, %v792
    %v864 = vpack.c.b16 %v795, %v794
    %v865 = vpack.c.b16 %v797, %v796
    %v866 = vpack.c.b16 %v799, %v798
    %v867 = vpack.c.b16 %v801, %v800
    %v868 = vpack.c.b16 %v803, %v802
    %v869 = vpack.c.b16 %v805, %v804
    %934 = vmatprep.subr.bf16.mxu0 0
    %935 = vmatpush1.bf16.msra.mxu0 %v806
    %936 = vmatprep.subr.bf16.mxu0 0
    %937 = vmatpush1.bf16.msra.mxu0 %v807
    %938 = vmatprep.subr.bf16.mxu0 0
    %939 = vmatpush1.bf16.msra.mxu0 %v808
    %940 = vmatprep.subr.bf16.mxu0 0
    %941 = vmatpush1.bf16.msra.mxu0 %v809
    %942 = vmatprep.subr.bf16.mxu0 0
    %943 = vmatpush1.bf16.msra.mxu0 %v810
    %944 = vmatprep.subr.bf16.mxu0 0
    %945 = vmatpush1.bf16.msra.mxu0 %v811
    %946 = vmatprep.subr.bf16.mxu0 0
    %947 = vmatpush1.bf16.msra.mxu0 %v812
    %948 = vmatprep.subr.bf16.mxu0 0
    %949 = vmatpush1.bf16.msra.mxu0 %v813
    %950 = vmatprep.subr.bf16.mxu0 0
    %951 = vmatpush1.bf16.msra.mxu0 %v814
    %952 = vmatprep.subr.bf16.mxu0 0
    %953 = vmatpush1.bf16.msra.mxu0 %v815
    %954 = vmatprep.subr.bf16.mxu0 0
    %955 = vmatpush1.bf16.msra.mxu0 %v816
    %956 = vmatprep.subr.bf16.mxu0 0
    %957 = vmatpush1.bf16.msra.mxu0 %v817
    %958 = vmatprep.subr.bf16.mxu0 0
    %959 = vmatpush1.bf16.msra.mxu0 %v818
    %960 = vmatprep.subr.bf16.mxu0 0
    %961 = vmatpush1.bf16.msra.mxu0 %v819
    %962 = vmatprep.subr.bf16.mxu0 0
    %963 = vmatpush1.bf16.msra.mxu0 %v820
    %964 = vmatprep.subr.bf16.mxu0 0
    %965 = vmatpush1.bf16.msra.mxu0 %v821
    %966 = vmatprep.mubr.bf16.mxu0 %v408
    %967 = vmatmul.mubr.bf16.gmra.mrb[0].mxu0 %v407
    %v968 = vpop.f32.mrb[0].mxu0
    %v969 = vadd.f32 %v548, %v968
    %v970 = vpop.f32.mrb[0].mxu0
    %v971 = vpop.f32.mrb[0].mxu0
    %v972 = vadd.f32 %v548, %v971
    %v973 = vpop.f32.mrb[0].mxu0
    %974 = vdwg.mxu0
    %975 = vmatprep.subr.bf16.mxu0 0
    %976 = vmatpush1.bf16.msra.mxu0 %v822
    %977 = vmatprep.subr.bf16.mxu0 0
    %978 = vmatpush1.bf16.msra.mxu0 %v823
    %979 = vmatprep.subr.bf16.mxu0 0
    %980 = vmatpush1.bf16.msra.mxu0 %v824
    %981 = vmatprep.subr.bf16.mxu0 0
    %982 = vmatpush1.bf16.msra.mxu0 %v825
    %983 = vmatprep.subr.bf16.mxu0 0
    %984 = vmatpush1.bf16.msra.mxu0 %v826
    %985 = vmatprep.subr.bf16.mxu0 0
    %986 = vmatpush1.bf16.msra.mxu0 %v827
    %987 = vmatprep.subr.bf16.mxu0 0
    %988 = vmatpush1.bf16.msra.mxu0 %v828
    %989 = vmatprep.subr.bf16.mxu0 0
    %990 = vmatpush1.bf16.msra.mxu0 %v829
    %991 = vmatprep.subr.bf16.mxu0 0
    %992 = vmatpush1.bf16.msra.mxu0 %v830
    %993 = vmatprep.subr.bf16.mxu0 0
    %994 = vmatpush1.bf16.msra.mxu0 %v831
    %995 = vmatprep.subr.bf16.mxu0 0
    %996 = vmatpush1.bf16.msra.mxu0 %v832
    %997 = vmatprep.subr.bf16.mxu0 0
    %998 = vmatpush1.bf16.msra.mxu0 %v833
    %999 = vmatprep.subr.bf16.mxu0 0
    %1000 = vmatpush1.bf16.msra.mxu0 %v834
    %1001 = vmatprep.subr.bf16.mxu0 0
    %1002 = vmatpush1.bf16.msra.mxu0 %v835
    %1003 = vmatprep.subr.bf16.mxu0 0
    %1004 = vmatpush1.bf16.msra.mxu0 %v836
    %1005 = vmatprep.subr.bf16.mxu0 0
    %1006 = vmatpush1.bf16.msra.mxu0 %v837
    %1007 = vmatprep.mubr.bf16.mxu0 %v410
    %1008 = vmatmul.mubr.bf16.gmra.mrb[0].mxu0 %v409
    %v1009 = vpop.f32.mrb[0].mxu0
    %v1010 = vadd.f32 %v969, %v1009
    %v1011 = vpop.f32.mrb[0].mxu0
    %v1012 = vpop.f32.mrb[0].mxu0
    %v1013 = vadd.f32 %v972, %v1012
    %v1014 = vpop.f32.mrb[0].mxu0
    %1015 = vdwg.mxu0
    %1016 = vmatprep.subr.bf16.mxu0 0
    %1017 = vmatpush1.bf16.msra.mxu0 %v838
    %1018 = vmatprep.subr.bf16.mxu0 0
    %1019 = vmatpush1.bf16.msra.mxu0 %v839
    %1020 = vmatprep.subr.bf16.mxu0 0
    %1021 = vmatpush1.bf16.msra.mxu0 %v840
    %1022 = vmatprep.subr.bf16.mxu0 0
    %1023 = vmatpush1.bf16.msra.mxu0 %v841
    %1024 = vmatprep.subr.bf16.mxu0 0
    %1025 = vmatpush1.bf16.msra.mxu0 %v842
    %1026 = vmatprep.subr.bf16.mxu0 0
    %1027 = vmatpush1.bf16.msra.mxu0 %v843
    %1028 = vmatprep.subr.bf16.mxu0 0
    %1029 = vmatpush1.bf16.msra.mxu0 %v844
    %1030 = vmatprep.subr.bf16.mxu0 0
    %1031 = vmatpush1.bf16.msra.mxu0 %v845
    %1032 = vmatprep.subr.bf16.mxu0 0
    %1033 = vmatpush1.bf16.msra.mxu0 %v846
    %1034 = vmatprep.subr.bf16.mxu0 0
    %1035 = vmatpush1.bf16.msra.mxu0 %v847
    %1036 = vmatprep.subr.bf16.mxu0 0
    %1037 = vmatpush1.bf16.msra.mxu0 %v848
    %1038 = vmatprep.subr.bf16.mxu0 0
    %1039 = vmatpush1.bf16.msra.mxu0 %v849
    %1040 = vmatprep.subr.bf16.mxu0 0
    %1041 = vmatpush1.bf16.msra.mxu0 %v850
    %1042 = vmatprep.subr.bf16.mxu0 0
    %1043 = vmatpush1.bf16.msra.mxu0 %v851
    %1044 = vmatprep.subr.bf16.mxu0 0
    %1045 = vmatpush1.bf16.msra.mxu0 %v852
    %1046 = vmatprep.subr.bf16.mxu0 0
    %1047 = vmatpush1.bf16.msra.mxu0 %v853
    %1048 = vmatprep.mubr.bf16.mxu0 %v412
    %1049 = vmatmul.mubr.bf16.gmra.mrb[0].mxu0 %v411
    %v1050 = vpop.f32.mrb[0].mxu0
    %v1051 = vadd.f32 %v1010, %v1050
    %v1052 = vpop.f32.mrb[0].mxu0
    %v1053 = vpop.f32.mrb[0].mxu0
    %v1054 = vadd.f32 %v1013, %v1053
    %v1055 = vpop.f32.mrb[0].mxu0
    %1056 = vdwg.mxu0
    %1057 = vmatprep.subr.bf16.mxu0 0
    %1058 = vmatpush1.bf16.msra.mxu0 %v854
    %1059 = vmatprep.subr.bf16.mxu0 0
    %1060 = vmatpush1.bf16.msra.mxu0 %v855
    %1061 = vmatprep.subr.bf16.mxu0 0
    %1062 = vmatpush1.bf16.msra.mxu0 %v856
    %1063 = vmatprep.subr.bf16.mxu0 0
    %1064 = vmatpush1.bf16.msra.mxu0 %v857
    %1065 = vmatprep.subr.bf16.mxu0 0
    %1066 = vmatpush1.bf16.msra.mxu0 %v858
    %1067 = vmatprep.subr.bf16.mxu0 0
    %1068 = vmatpush1.bf16.msra.mxu0 %v859
    %1069 = vmatprep.subr.bf16.mxu0 0
    %1070 = vmatpush1.bf16.msra.mxu0 %v860
    %1071 = vmatprep.subr.bf16.mxu0 0
    %1072 = vmatpush1.bf16.msra.mxu0 %v861
    %1073 = vmatprep.subr.bf16.mxu0 0
    %1074 = vmatpush1.bf16.msra.mxu0 %v862
    %1075 = vmatprep.subr.bf16.mxu0 0
    %1076 = vmatpush1.bf16.msra.mxu0 %v863
    %1077 = vmatprep.subr.bf16.mxu0 0
    %1078 = vmatpush1.bf16.msra.mxu0 %v864
    %1079 = vmatprep.subr.bf16.mxu0 0
    %1080 = vmatpush1.bf16.msra.mxu0 %v865
    %1081 = vmatprep.subr.bf16.mxu0 0
    %1082 = vmatpush1.bf16.msra.mxu0 %v866
    %1083 = vmatprep.subr.bf16.mxu0 0
    %1084 = vmatpush1.bf16.msra.mxu0 %v867
    %1085 = vmatprep.subr.bf16.mxu0 0
    %1086 = vmatpush1.bf16.msra.mxu0 %v868
    %1087 = vmatprep.subr.bf16.mxu0 0
    %1088 = vmatpush1.bf16.msra.mxu0 %v869
    %1089 = vmatprep.mubr.bf16.mxu0 %v414
    %1090 = vmatmul.mubr.bf16.gmra.mrb[0].mxu0 %v413
    %v1091 = vpop.f32.mrb[0].mxu0
    %v1092 = vadd.f32 %v1051, %v1091
    %v1093 = vpop.f32.mrb[0].mxu0
    %v1094 = vpop.f32.mrb[0].mxu0
    %v1095 = vadd.f32 %v1054, %v1094
    %v1096 = vpop.f32.mrb[0].mxu0
    %1097 = vdwg.mxu0
    %1098 = vst [vmem:[%s5] sm:$0xff] %v1092
    %1099 = vst [vmem:[%s5 + $0x8] sm:$0xff] %v1095
    // Predicated region
    $region38: #{prediction_model_forward.1} parent=1 // pred_check
      _
    $region39: #{prediction_model_forward.1} parent=1 // pred_check_branch
      %1101 = sbr.rel (0) target = $region41
    $region40: #{prediction_model_forward.1} parent=1 // pred_region
      _
    $region41: #{prediction_model_forward.1} parent=1 // pred_fallthru
      _
    // Predicated region
    $region42: #{prediction_model_forward.1} parent=1 // pred_check
      _
    $region43: #{prediction_model_forward.1} parent=1 // pred_check_branch
      %1103 = sbr.rel (0) target = $region45
    $region44: #{prediction_model_forward.1} parent=1 // pred_region
      _
    $region45: #{prediction_model_forward.1} parent=1 // pred_fallthru
      _
    %1104 = vsyncpa [#allocation3], 1
    %1105 = vsyncpa [#allocation5], 1
    %1106 = vsyncpa [#allocation8], 1

</llo_original>
